<compile_context>
chip_gen: v7x
topology: tpu7x:2x2x1
jax: 0.10.0
libtpu: 0.0.40
codegen_flags: <defaults>
</compile_context>

<pallas_src>
import math

import jax
import jax.numpy as jnp
from jax.experimental import pallas as pl
from jax.experimental.pallas import tpu as pltpu

LANES = 128
# ~2 MiB per block; 2 in-buffers + 2 out-buffers of double-buffering ≈ 8 MiB
# VMEM, safely inside the default scoped limit on v5e / v6e / v7x.
TARGET_BLOCK_BYTES = 2 * 1024 * 1024


def _copy_kernel(x_ref, o_ref):
    # Identity copy of the current (tile_rows, W) block (full-lane stores).
    o_ref[...] = x_ref[...]


def _resolve_size(numel, size):
    """Resolve a PyTorch-style view size (supports a single -1)."""
    if isinstance(size, int):
        size = (size,)
    size = tuple(int(s) for s in size)
    if -1 in size:
        idx = size.index(-1)
        known = 1
        for i, s in enumerate(size):
            if i != idx:
                known *= s
        assert numel % known == 0, "view size incompatible with number of elements"
        size = size[:idx] + (numel // known,) + size[idx + 1:]
    assert math.prod(size) == numel, "view size incompatible with number of elements"
    return size


def view_pallas(x, size):
    """Equivalent of torch.Tensor.view(size); data movement (when any) in Pallas."""
    numel = x.size
    out_size = _resolve_size(numel, size)

    itemsize = jnp.dtype(x.dtype).itemsize
    # Minimum legal second-to-last tile dim per dtype: 8 (32-bit), 16 (16-bit), 32 (8-bit).
    min_sub = max(8, 32 // itemsize)
    min_tile = min_sub * LANES

    if numel == 0 or numel % min_tile != 0:
        # .view() is metadata-only; rather than padding/concatenating (which
        # would add full extra HBM copies around the kernel) just reinterpret
        # the shape.
        # TODO(synk): torch .view() errors on non-contiguous tensors; JAX
        # arrays are always logically contiguous, so that case cannot arise.
        return x.reshape(out_size)

    # Lane-dense 2-D layout: fold as many 128-lane groups as possible into the
    # last dimension (row-major order is preserved, so this is still the same
    # flat element order PyTorch's contiguous .view uses).
    n_tiles = numel // min_tile
    lane_fold = 1
    for f in (64, 32, 16, 8, 4, 2):
        if n_tiles % f == 0:
            lane_fold = f
            break
    W = LANES * lane_fold
    R = (n_tiles // lane_fold) * min_sub          # R * W == numel
    x2d = x.reshape(R, W)

    # Big blocks so the pipeline is HBM-bound, not per-step-overhead-bound;
    # row count rounded to the dtype's sublane multiple.
    rows_for_target = max(min_sub, TARGET_BLOCK_BYTES // (W * itemsize))
    tile_rows = min(R, (rows_for_target // min_sub) * min_sub)

    y2d = pl.pallas_call(
        _copy_kernel,
        out_shape=jax.ShapeDtypeStruct((R, W), x.dtype),
        grid_spec=pltpu.PrefetchScalarGridSpec(
            num_scalar_prefetch=0,
            grid=(pl.cdiv(R, tile_rows),),
            in_specs=[pl.BlockSpec((tile_rows, W), lambda i: (i, 0))],
            out_specs=pl.BlockSpec((tile_rows, W), lambda i: (i, 0)),
        ),
        compiler_params=pltpu.CompilerParams(
            dimension_semantics=("parallel",),
        ),
        cost_estimate=pl.CostEstimate(
            flops=0, transcendentals=0, bytes_accessed=2 * numel * itemsize),
        # Identity copy: write the result in place over the (freshly reshaped)
        # input buffer instead of allocating a second full HBM buffer.
        input_output_aliases={0: 0},
    )(x2d)

    return y2d.reshape(out_size)


if __name__ == "__main__":
    key = jax.random.PRNGKey(0)
    # Small input consistent with an encoder feature map: N=2, C=4, H=W=16.
    x = jax.random.normal(key, (2, 4, 16, 16), dtype=jnp.float32)

    # Reference first (PyTorch .view on a contiguous tensor == reshape).
    y_ref = x.reshape(2, -1)

    # View(size=(2, -1)): flatten per-batch features, as commonly used in encoders.
    y = view_pallas(x, (2, -1))
    jax.block_until_ready(y)

    assert y.shape == y_ref.shape, (y.shape, y_ref.shape)
    assert y.dtype == x.dtype
    assert jnp.array_equal(y, y_ref), "mismatch vs reference reshape"

    print("KERNEL_OK")
</pallas_src>

<mosaic_0001>
module attributes {stable_mosaic.version = 11 : i64} {
  func.func @_copy_kernel(%arg0: i32, %arg1: memref<8x256xf32, #tpu.memory_space<vmem>>, %arg2: memref<8x256xf32, #tpu.memory_space<vmem>>) attributes {dimension_semantics = [#tpu.dimension_semantics<parallel>], iteration_bounds = array<i64: 1>, scalar_prefetch = 0 : i64, scratch_operands = 0 : i64, tpu.core_type = #tpu.core_type<tc>, window_params = [{transform_indices = @transform_0, window_bounds = array<i64: 8, 256>}, {transform_indices = @transform_1, window_bounds = array<i64: 8, 256>}]} {
    %c0 = arith.constant 0 : index
    %c0_0 = arith.constant 0 : index
    %0 = vector.load %arg1[%c0, %c0_0] : memref<8x256xf32, #tpu.memory_space<vmem>>, vector<8x256xf32>
    %c0_1 = arith.constant 0 : index
    %c0_2 = arith.constant 0 : index
    %1 = vector.load %arg2[%c0_1, %c0_2] : memref<8x256xf32, #tpu.memory_space<vmem>>, vector<8x256xf32>
    tpu.vector_store %arg2[%c0_1, %c0_2], %0 {strides = array<i32>} : memref<8x256xf32, #tpu.memory_space<vmem>>, vector<8x256xf32>,
    return
  }
  func.func @transform_0(%arg0: i32) -> (i32, i32) {
    %c0_i32 = arith.constant 0 : i32
    %c0_i32_0 = arith.constant 0 : i32
    return %arg0, %c0_i32 : i32, i32
  }
  func.func @transform_1(%arg0: i32) -> (i32, i32) {
    %c0_i32 = arith.constant 0 : i32
    %c0_i32_0 = arith.constant 0 : i32
    return %arg0, %c0_i32 : i32, i32
  }
}

</mosaic_0001>

<llo_original>
// kernel: tpu_custom_call.1
$region0: #{tpu_custom_call.1}
  #allocation0 [shape = 'u32[]', space=smem, size = 0x4, offset = 0x4, fixed_abs, tag = 'smem constant byte address 0x4 - core index']
  #allocation1 [shape = 'u32[144,128]{1,0:T(1,128)}', space=vmem, size = 0x12000, scoped, tag = 'internal scratch']
  %s0 = inlined_call_operand.hbm [shape: f32[8,256], index: 0, kind: input, shape index: {}, may-alias: {0,1}]
  %s1 = inlined_call_operand.hbm [shape: f32[8,256], index: 1, kind: output, shape index: {}, may-alias: {0,1}]
  %s2 = sld [smem:[#allocation0]]
  $region18: #{tpu_custom_call.1} parent=0
    _
  %s4 = ssub.s32 1, %s2
  %s5 = scalar_select 0, %s4, %s2
  $region1: #{tpu_custom_call.1} parent=0
    #allocation2 [shape = 'u8[8192]{0}', space=vmem, size = 0x2000, scoped, tag = 'input window, operand 0, single buffered']
    #allocation3 [shape = 's32[1]{0}', space=sflag, size = 0x4, scoped, tag = 'scoped memory for tpu_custom_call.1']
    #allocation4 [shape = 's32[1]{0}', space=sflag, size = 0x4, scoped, tag = 'scoped memory for tpu_custom_call.1']
    #allocation5 [shape = 'u8[8192]{0}', space=vmem, size = 0x2000, scoped, tag = 'output window, operand 0, single buffered']
    %6 = vsyncpa [#allocation3], 0
    %7 = vsyncpa [#allocation4], 0
    // Predicated region
    $region2: #{tpu_custom_call.1} parent=1 // pred_check
      _
    $region3: #{tpu_custom_call.1} parent=1 // pred_check_branch
      %9 = sbr.rel (0) target = $region5
    $region4: #{tpu_custom_call.1} parent=1 // pred_region
      %s11 = ssub.s32 256, 256
      %12 = vsyncadd [#allocation3], %s11
      %s14 = sshll.u32 [#allocation2], 4
      %s15 = int_to_ptr.vmem [resolvable:$true] %s14
      %17 = dma.hbm_to_vmem [thread:$0]  %s0, 256, %s15, [#allocation3]
    $region5: #{tpu_custom_call.1} parent=1 // pred_fallthru
      _
    // Predicated region
    $region6: #{tpu_custom_call.1} parent=1 // pred_check
      _
    $region7: #{tpu_custom_call.1} parent=1 // pred_check_branch
      %19 = sbr.rel (0) target = $region9
    $region8: #{tpu_custom_call.1} parent=1 // pred_region
      %20 = dma.done [#allocation3], 256
    $region9: #{tpu_custom_call.1} parent=1 // pred_fallthru
      _
    %v21 = vld [vmem:[#allocation2] sm:$0xff]
    %v22 = vld [vmem:[#allocation2 + $0x8] sm:$0xff]
    %23 = vst [vmem:[#allocation5] sm:$0xff] %v21
    %24 = vst [vmem:[#allocation5 + $0x8] sm:$0xff] %v22
    // Predicated region
    $region10: #{tpu_custom_call.1} parent=1 // pred_check
      _
    $region11: #{tpu_custom_call.1} parent=1 // pred_check_branch
      %26 = sbr.rel (0) target = $region13
    $region12: #{tpu_custom_call.1} parent=1 // pred_region
      %s28 = ssub.s32 256, 256
      %29 = vsyncadd [#allocation4], %s28
      %s31 = sshll.u32 [#allocation5], 4
      %s32 = int_to_ptr.vmem [resolvable:$true] %s31
      %34 = dma.vmem_to_hbm [thread:$0]  %s32, 256, %s1, [#allocation4]
    $region13: #{tpu_custom_call.1} parent=1 // pred_fallthru
      _
    // Predicated region
    $region14: #{tpu_custom_call.1} parent=1 // pred_check
      _
    $region15: #{tpu_custom_call.1} parent=1 // pred_check_branch
      %36 = sbr.rel (0) target = $region17
    $region16: #{tpu_custom_call.1} parent=1 // pred_region
      %37 = dma.done [#allocation4], 256
    $region17: #{tpu_custom_call.1} parent=1 // pred_fallthru
      _
    %38 = vsyncpa [#allocation3], 1
    %39 = vsyncpa [#allocation4], 1

</llo_original>
